<compile_context>
chip_gen: v5e
topology: v5e:2x2
jax: 0.10.0
libtpu: 0.0.40
codegen_flags: <defaults>
</compile_context>

<pallas_src>
import numpy as np

import jax
import jax.numpy as jnp
from jax.experimental import pallas as pl
from jax.experimental.pallas import tpu as pltpu  # noqa: F401  (TPU backend)


def _alias_passthrough_kernel(a_in, b_in, c_in, d_in,
                              a_out, b_out, c_out, d_out):
    """Pure aliasing no-op.

    Each output buffer IS the corresponding input buffer (see
    input_output_aliases in the pallas_call below), so there is nothing to
    compute, DMA, or stage: zero HBM traffic, zero VMEM footprint, no vector
    or scalar work.
    """
    del a_in, b_in, c_in, d_in, a_out, b_out, c_out, d_out


def multiple_tensor_return(a, b, c, d, e):
    """Mirrors TestMultipleTensorReturn.forward(a, b, c, d, e)."""
    # Raw HBM refs, no auto-DMA.  With the aliasing below the outputs are
    # pinned to the (HBM-resident) input buffers, so nothing is parked in
    # VMEM and nothing is copied.
    hbm = pl.BlockSpec(memory_space=pl.ANY)

    a_out, b_out, c_out, d_out = pl.pallas_call(
        _alias_passthrough_kernel,
        out_shape=(
            jax.ShapeDtypeStruct(a.shape, a.dtype),
            jax.ShapeDtypeStruct(b.shape, b.dtype),
            jax.ShapeDtypeStruct(c.shape, c.dtype),
            jax.ShapeDtypeStruct(d.shape, d.dtype),
        ),
        in_specs=[hbm, hbm, hbm, hbm],
        out_specs=(hbm, hbm, hbm, hbm),
        # Output i is the same buffer as input i -> zero-copy pass-through.
        input_output_aliases={0: 0, 1: 1, 2: 2, 3: 3},
    )(a, b, c, d)

    # Bool tensor: identity return (same array), matching PyTorch exactly.
    e_out = e

    return (a_out, b_out, c_out, d_out, e_out)


# Donating a..d lets XLA honor the aliasing with no defensive copy
# (review item: input_output_aliases + donate_argnums => true zero-copy).
multiple_tensor_return_jit = jax.jit(
    multiple_tensor_return, donate_argnums=(0, 1, 2, 3)
)


if __name__ == "__main__":
    key = jax.random.PRNGKey(0)
    k_a, k_b, k_c, k_d, k_e = jax.random.split(key, 5)

    # Small [-1, -1] dynamic 2-D shapes for the demo (deliberately varied).
    a = jax.random.normal(k_a, (8, 128), dtype=jnp.float32)
    # torch.float64 input; carried as float32 on TPU (see dtype notes above).
    b = jax.random.normal(k_b, (16, 128), dtype=jnp.float32)
    c = jax.random.randint(k_c, (8, 256), minval=-100, maxval=100,
                           dtype=jnp.int32)
    # torch.int64 input; carried as int32 on TPU (see dtype notes above).
    d = jax.random.randint(k_d, (32, 128), minval=-1000, maxval=1000,
                           dtype=jnp.int32)
    e = jax.random.bernoulli(k_e, p=0.5, shape=(8, 128))  # bool

    # Snapshot expected values on host BEFORE the call: a..d are donated to
    # the jitted function (zero-copy aliasing), so their original device
    # buffers must not be read afterwards.
    a_np = np.asarray(a)
    b_np = np.asarray(b)
    c_np = np.asarray(c)
    d_np = np.asarray(d)
    e_np = np.asarray(e)

    outs = multiple_tensor_return_jit(a, b, c, d, e)
    outs = jax.block_until_ready(outs)
    a_out, b_out, c_out, d_out, e_out = outs

    assert a_out.dtype == jnp.float32 and np.array_equal(np.asarray(a_out), a_np)
    assert b_out.dtype == jnp.float32 and np.array_equal(np.asarray(b_out), b_np)
    assert c_out.dtype == jnp.int32 and np.array_equal(np.asarray(c_out), c_np)
    assert d_out.dtype == jnp.int32 and np.array_equal(np.asarray(d_out), d_np)
    assert e_out.dtype == jnp.bool_ and np.array_equal(np.asarray(e_out), e_np)

    print("KERNEL_OK")
</pallas_src>

<mosaic_0001>
module attributes {stable_mosaic.version = 11 : i64} {
  func.func @_alias_passthrough_kernel(%arg0: memref<8x128xf32, #tpu.memory_space<any>>, %arg1: memref<16x128xf32, #tpu.memory_space<any>>, %arg2: memref<8x256xi32, #tpu.memory_space<any>>, %arg3: memref<32x128xi32, #tpu.memory_space<any>>, %arg4: memref<8x128xf32, #tpu.memory_space<any>>, %arg5: memref<16x128xf32, #tpu.memory_space<any>>, %arg6: memref<8x256xi32, #tpu.memory_space<any>>, %arg7: memref<32x128xi32, #tpu.memory_space<any>>) attributes {dimension_semantics = [], scalar_prefetch = 0 : i64, scratch_operands = 0 : i64, tpu.core_type = #tpu.core_type<tc>} {
    return
  }
}

</mosaic_0001>

<llo_original>
// kernel: multiple_tensor_return.1
$region0: #{multiple_tensor_return.1}
  #allocation0 [shape = 'u32[]', space=smem, size = 0x4, offset = 0x4, fixed_abs, tag = 'smem constant byte address 0x4 - core index']
  #allocation1 [shape = 'u32[72,128]{1,0:T(1,128)}', space=vmem, size = 0x9000, scoped, tag = 'internal scratch']
  %s0 = inlined_call_operand.hbm [shape: f32[8,128], index: 0, kind: input, shape index: {}, may-alias: {0,4}]
  %s1 = inlined_call_operand.hbm [shape: f32[16,128], index: 1, kind: input, shape index: {}, may-alias: {1,5}]
  %s2 = inlined_call_operand.hbm [shape: s32[8,256], index: 2, kind: input, shape index: {}, may-alias: {2,6}]
  %s3 = inlined_call_operand.hbm [shape: s32[32,128], index: 3, kind: input, shape index: {}, may-alias: {3,7}]
  %s4 = inlined_call_operand.hbm [shape: f32[8,128], index: 4, kind: output, shape index: {0}, may-alias: {0,4}]
  %s5 = inlined_call_operand.hbm [shape: f32[16,128], index: 5, kind: output, shape index: {1}, may-alias: {1,5}]
  %s6 = inlined_call_operand.hbm [shape: s32[8,256], index: 6, kind: output, shape index: {2}, may-alias: {2,6}]
  %s7 = inlined_call_operand.hbm [shape: s32[32,128], index: 7, kind: output, shape index: {3}, may-alias: {3,7}]
  %8 = xla_tuple %s4, %s5, %s6, %s7
  %s9 = sld [smem:[#allocation0]]
  $region2: #{multiple_tensor_return.1} parent=0
    _
  %s11 = ssub.s32 1, %s9
  %s12 = scalar_select 0, %s11, %s9

</llo_original>
